<compile_context>
chip_gen: v5e
topology: v5e:2x2
jax: 0.10.0
libtpu: 0.0.40
codegen_flags: <defaults>
</compile_context>

<pallas_src>
import jax
import jax.numpy as jnp
from jax.experimental import pallas as pl
from jax.experimental.pallas import tpu as pltpu

LANE = 128  # all feature widths are zero-padded to one full lane group


# ----------------------------------------------------------------------------
# Kernel: one batch tile per grid step.
#   x_ref     : [TILE_B, state_dim]
#   wx_ref    : [state_dim, 256]      ([fused layer-1 weight | priorK])
#   w_hid_ref : [3, 128, 128]         (fused layer-2, layer-3, final-net weights)
#   b_ref     : [4, 1, 128]           (biases of layers 1..3 and final net)
#   out_ref   : [TILE_B, 128]         (action padded to 128 lanes)
# ----------------------------------------------------------------------------
def _actor_kernel(x_ref, wx_ref, w_hid_ref, b_ref, out_ref):
    x = x_ref[...]                                               # [TB, S]

    def dot(a, b):
        return jnp.dot(a, b, preferred_element_type=jnp.float32)

    # single MXU pass for both x-consuming matmuls; lane-group slices are free
    xw = dot(x, wx_ref[...])                                     # [TB, 256]
    h = jnp.tanh(xw[:, :LANE] + b_ref[0])                        # layer 1
    h = jnp.tanh(dot(h, w_hid_ref[0]) + b_ref[1])                # layer 2
    h = jnp.tanh(dot(h, w_hid_ref[1]) + b_ref[2])                # layer 3
    a = dot(h, w_hid_ref[2]) + b_ref[3]                          # final linear
    out_ref[...] = jnp.tanh(a) + xw[:, LANE:]                    # + state @ priorK


def _tensorcores_per_chip():
    """Best-effort: 2 TCs on v7x, 1 on v5e/v6e (grid is a serial loop there)."""
    try:
        kind = jax.devices()[0].device_kind.lower()
    except Exception:
        return 1
    return 2 if "v7" in kind else 1


def actor_forward(state, packed, *, tile_b=None, max_tile_rows=4096):
    """state: [B, state_dim] f32 -> actions [B, action_dim] f32."""
    b, state_dim = state.shape

    if tile_b is None:
        # One tile per TensorCore; avoid extra grid steps (0.35 us each) since
        # the per-step compute here is well under 1 us.
        n_target = _tensorcores_per_chip()
        tile_b = pl.cdiv(b, n_target)
        # Cap for VMEM portability (x + out double-buffered ~1.2 KB/row; v7x
        # has only 64 MiB physical VMEM) and round to a sublane multiple of 8.
        tile_b = min(tile_b, max_tile_rows)
        tile_b = max(8, ((tile_b + 7) // 8) * 8)

    n_tiles = pl.cdiv(b, tile_b)
    bp = n_tiles * tile_b
    if bp != b:  # pad batch to a whole number of tiles; sliced off below
        state = jnp.pad(state, ((0, bp - b), (0, 0)))

    w_x, w_hid, bias = packed["w_x"], packed["w_hid"], packed["b"]
    out = pl.pallas_call(
        _actor_kernel,
        out_shape=jax.ShapeDtypeStruct((bp, LANE), jnp.float32),
        grid=(n_tiles,),
        in_specs=[
            pl.BlockSpec((tile_b, state_dim), lambda i: (i, 0)),   # streams
            pl.BlockSpec(w_x.shape, lambda i: (0, 0)),             # resident
            pl.BlockSpec(w_hid.shape, lambda i: (0, 0, 0)),        # resident
            pl.BlockSpec(bias.shape, lambda i: (0, 0, 0)),         # resident
        ],
        out_specs=pl.BlockSpec((tile_b, LANE), lambda i: (i, 0)),
        compiler_params=pltpu.CompilerParams(
            dimension_semantics=("parallel",)),   # uses both TCs on v7x
    )(state, w_x, w_hid, bias)
    return out[:b, :packed["action_dim"]]


# ----------------------------------------------------------------------------
# Host-side packing: block-diagonal fusion + zero-pad to 128 lanes, and
# concatenation of the layer-1 weight with priorK into one [state_dim, 256]
# slab so the kernel does a single matmul on x.
# ----------------------------------------------------------------------------
def pack_params(p, state_dim, other_dim, action_dim):
    h34 = p["ow1"].shape[1]        # 3 * mid_dim // 4
    h2 = p["ow3"].shape[1]         # mid_dim // 2
    hid = 2 * h34                  # fused hidden width (layers 1 & 2)
    mid = 2 * h2                   # fused layer-3 output width
    assert max(state_dim, hid, mid, action_dim) <= LANE

    # layer 1: blockdiag(ow1, iw1)  -> [state_dim, 128]
    w1 = (jnp.zeros((state_dim, LANE), jnp.float32)
          .at[:other_dim, :h34].set(p["ow1"])
          .at[other_dim:, h34:hid].set(p["iw1"]))
    # layer 2: blockdiag(ow2, iw2)  -> [128, 128]
    w2 = (jnp.zeros((LANE, LANE), jnp.float32)
          .at[:h34, :h34].set(p["ow2"])
          .at[h34:hid, h34:hid].set(p["iw2"]))
    # layer 3: blockdiag(ow3, iw3)  -> [128, 128]; output lanes = [tmp1 | tmp2]
    w3 = (jnp.zeros((LANE, LANE), jnp.float32)
          .at[:h34, :h2].set(p["ow3"])
          .at[h34:hid, h2:mid].set(p["iw3"]))
    # final net (already consumes the [tmp1|tmp2] concat order)
    wn = jnp.zeros((LANE, LANE), jnp.float32).at[:mid, :action_dim].set(p["nw"])
    # frozen priorK, columns padded to 128
    pk = jnp.zeros((state_dim, LANE), jnp.float32).at[:, :action_dim].set(p["pk"])

    def pad_bias(*segs):
        b = jnp.zeros((1, LANE), jnp.float32)
        off = 0
        for s in segs:
            b = b.at[:, off:off + s.shape[1]].set(s)
            off += s.shape[1]
        return b

    b1 = pad_bias(p["ob1"], p["ib1"])
    b2 = pad_bias(p["ob2"], p["ib2"])
    b3 = pad_bias(p["ob3"], p["ib3"])
    bn = pad_bias(p["nb"])

    return {
        "w_x": jnp.concatenate([w1, pk], axis=1),    # [state_dim, 256]
        "w_hid": jnp.stack([w2, w3, wn]),            # [3, 128, 128]
        "b": jnp.stack([b1, b2, b3, bn]),            # [4, 1, 128]
        "action_dim": action_dim,
    }


# ----------------------------------------------------------------------------
# Deterministic synthetic parameters (mirror the module's __init__ shapes;
# values are NOT a checkpoint) + pure-JAX reference forward.
# ----------------------------------------------------------------------------
def init_params(key, mid_dim, state_dim, action_dim, integrator_dim):
    other_dim = state_dim - integrator_dim
    h34 = 3 * mid_dim // 4
    h2 = mid_dim // 2

    def linear(k, fan_in, fan_out):
        kw, kb = jax.random.split(k)
        bound = 1.0 / jnp.sqrt(float(fan_in))
        w = jax.random.uniform(kw, (fan_in, fan_out), jnp.float32, -bound, bound)
        b = jax.random.uniform(kb, (1, fan_out), jnp.float32, -bound, bound)
        return w, b

    keys = jax.random.split(key, 8)
    ow1, ob1 = linear(keys[0], other_dim, h34)
    ow2, ob2 = linear(keys[1], h34, h34)
    ow3, ob3 = linear(keys[2], h34, h2)
    iw1, ib1 = linear(keys[3], integrator_dim, h34)
    iw2, ib2 = linear(keys[4], h34, h34)
    iw3, ib3 = linear(keys[5], h34, h2)
    # final layer: layer_norm(net[-1], std=0.1) -> small weight, bias 0.1
    nw = jax.random.normal(keys[6], (2 * h2, action_dim), jnp.float32) * 0.1
    nb = jnp.full((1, action_dim), 0.1, jnp.float32)
    # priorK = randn(state_dim, action_dim) * 0.01 (frozen)
    pk = jax.random.normal(keys[7], (state_dim, action_dim), jnp.float32) * 0.01

    return {
        "ow1": ow1, "ob1": ob1, "ow2": ow2, "ob2": ob2, "ow3": ow3, "ob3": ob3,
        "iw1": iw1, "ib1": ib1, "iw2": iw2, "ib2": ib2, "iw3": iw3, "ib3": ib3,
        "nw": nw, "nb": nb, "pk": pk,
    }, other_dim


def reference_forward(state, p, other_dim):
    xo, xi = state[:, :other_dim], state[:, other_dim:]
    t1 = jnp.tanh(xo @ p["ow1"] + p["ob1"])
    t1 = jnp.tanh(t1 @ p["ow2"] + p["ob2"])
    t1 = jnp.tanh(t1 @ p["ow3"] + p["ob3"])
    t2 = jnp.tanh(xi @ p["iw1"] + p["ib1"])
    t2 = jnp.tanh(t2 @ p["iw2"] + p["ib2"])
    t2 = jnp.tanh(t2 @ p["iw3"] + p["ib3"])
    a = jnp.concatenate([t1, t2], axis=-1) @ p["nw"] + p["nb"]
    return jnp.tanh(a) + state @ p["pk"]


if __name__ == "__main__":
    mid_dim, state_dim, action_dim, integrator_dim = 32, 16, 4, 4
    batch = 256   # many states per call to amortize launch/DMA overhead

    key = jax.random.PRNGKey(0)
    pkey, skey = jax.random.split(key)
    params, other_dim = init_params(pkey, mid_dim, state_dim, action_dim,
                                    integrator_dim)
    packed = pack_params(params, state_dim, other_dim, action_dim)
    state = jax.random.normal(skey, (batch, state_dim), jnp.float32)

    out = jax.block_until_ready(actor_forward(state, packed))
    ref = reference_forward(state, params, other_dim)

    assert out.shape == (batch, action_dim)
    assert jnp.allclose(out, ref, atol=1e-4, rtol=1e-4), \
        float(jnp.max(jnp.abs(out - ref)))
    print("KERNEL_OK")
</pallas_src>

<mosaic_0001>
module attributes {stable_mosaic.version = 11 : i64} {
  func.func @_actor_kernel(%arg0: i32, %arg1: memref<256x16xf32, #tpu.memory_space<vmem>>, %arg2: memref<16x256xf32, #tpu.memory_space<vmem>>, %arg3: memref<3x128x128xf32, #tpu.memory_space<vmem>>, %arg4: memref<4x1x128xf32, #tpu.memory_space<vmem>>, %arg5: memref<256x128xf32, #tpu.memory_space<vmem>>) attributes {dimension_semantics = [#tpu.dimension_semantics<parallel>], iteration_bounds = array<i64: 1>, scalar_prefetch = 0 : i64, scratch_operands = 0 : i64, tpu.core_type = #tpu.core_type<tc>, window_params = [{transform_indices = @transform_0, window_bounds = array<i64: 256, 16>}, {pipeline_mode = #tpu.pipeline_mode<synchronous>, transform_indices = @transform_1, window_bounds = array<i64: 16, 256>}, {pipeline_mode = #tpu.pipeline_mode<synchronous>, transform_indices = @transform_2, window_bounds = array<i64: 3, 128, 128>}, {pipeline_mode = #tpu.pipeline_mode<synchronous>, transform_indices = @transform_3, window_bounds = array<i64: 4, 1, 128>}, {transform_indices = @transform_4, window_bounds = array<i64: 256, 128>}]} {
    %c0 = arith.constant 0 : index
    %c0_0 = arith.constant 0 : index
    %0 = vector.load %arg1[%c0, %c0_0] : memref<256x16xf32, #tpu.memory_space<vmem>>, vector<256x16xf32>
    %c0_1 = arith.constant 0 : index
    %c0_2 = arith.constant 0 : index
    %1 = vector.load %arg2[%c0_1, %c0_2] : memref<16x256xf32, #tpu.memory_space<vmem>>, vector<16x256xf32>
    %cst = arith.constant dense<0.000000e+00> : vector<256x256xf32>
    %2 = tpu.matmul %0, %1, %cst {dimension_numbers = #tpu.dot_dimension_numbers<[1], [0], [0], [1], [0, 0, 1, 1], [], []>} : vector<256x16xf32>, vector<16x256xf32>, vector<256x256xf32> -> vector<256x256xf32>
    %3 = vector.extract_strided_slice %2 {offsets = [0, 0], sizes = [256, 128], strides = [1, 1]} : vector<256x256xf32> to vector<256x128xf32>
    %c0_3 = arith.constant 0 : index
    %c0_4 = arith.constant 0 : index
    %c0_5 = arith.constant 0 : index
    %4 = vector.load %arg4[%c0_3, %c0_4, %c0_5] : memref<4x1x128xf32, #tpu.memory_space<vmem>>, vector<1x1x128xf32>
    %5 = vector.shape_cast %4 : vector<1x1x128xf32> to vector<1x128xf32>
    %6 = vector.broadcast %5 : vector<1x128xf32> to vector<256x128xf32>
    %7 = arith.addf %3, %6 : vector<256x128xf32>
    %8 = math.tanh %7 : vector<256x128xf32>
    %c0_6 = arith.constant 0 : index
    %c0_7 = arith.constant 0 : index
    %c0_8 = arith.constant 0 : index
    %9 = vector.load %arg3[%c0_6, %c0_7, %c0_8] : memref<3x128x128xf32, #tpu.memory_space<vmem>>, vector<1x128x128xf32>
    %10 = vector.shape_cast %9 : vector<1x128x128xf32> to vector<128x128xf32>
    %cst_9 = arith.constant dense<0.000000e+00> : vector<256x128xf32>
    %11 = tpu.matmul %8, %10, %cst_9 {dimension_numbers = #tpu.dot_dimension_numbers<[1], [0], [0], [1], [0, 0, 1, 1], [], []>} : vector<256x128xf32>, vector<128x128xf32>, vector<256x128xf32> -> vector<256x128xf32>
    %c1 = arith.constant 1 : index
    %c0_10 = arith.constant 0 : index
    %c0_11 = arith.constant 0 : index
    %12 = vector.load %arg4[%c1, %c0_10, %c0_11] : memref<4x1x128xf32, #tpu.memory_space<vmem>>, vector<1x1x128xf32>
    %13 = vector.shape_cast %12 : vector<1x1x128xf32> to vector<1x128xf32>
    %14 = vector.broadcast %13 : vector<1x128xf32> to vector<256x128xf32>
    %15 = arith.addf %11, %14 : vector<256x128xf32>
    %16 = math.tanh %15 : vector<256x128xf32>
    %c1_12 = arith.constant 1 : index
    %c0_13 = arith.constant 0 : index
    %c0_14 = arith.constant 0 : index
    %17 = vector.load %arg3[%c1_12, %c0_13, %c0_14] : memref<3x128x128xf32, #tpu.memory_space<vmem>>, vector<1x128x128xf32>
    %18 = vector.shape_cast %17 : vector<1x128x128xf32> to vector<128x128xf32>
    %cst_15 = arith.constant dense<0.000000e+00> : vector<256x128xf32>
    %19 = tpu.matmul %16, %18, %cst_15 {dimension_numbers = #tpu.dot_dimension_numbers<[1], [0], [0], [1], [0, 0, 1, 1], [], []>} : vector<256x128xf32>, vector<128x128xf32>, vector<256x128xf32> -> vector<256x128xf32>
    %c2 = arith.constant 2 : index
    %c0_16 = arith.constant 0 : index
    %c0_17 = arith.constant 0 : index
    %20 = vector.load %arg4[%c2, %c0_16, %c0_17] : memref<4x1x128xf32, #tpu.memory_space<vmem>>, vector<1x1x128xf32>
    %21 = vector.shape_cast %20 : vector<1x1x128xf32> to vector<1x128xf32>
    %22 = vector.broadcast %21 : vector<1x128xf32> to vector<256x128xf32>
    %23 = arith.addf %19, %22 : vector<256x128xf32>
    %24 = math.tanh %23 : vector<256x128xf32>
    %c2_18 = arith.constant 2 : index
    %c0_19 = arith.constant 0 : index
    %c0_20 = arith.constant 0 : index
    %25 = vector.load %arg3[%c2_18, %c0_19, %c0_20] : memref<3x128x128xf32, #tpu.memory_space<vmem>>, vector<1x128x128xf32>
    %26 = vector.shape_cast %25 : vector<1x128x128xf32> to vector<128x128xf32>
    %cst_21 = arith.constant dense<0.000000e+00> : vector<256x128xf32>
    %27 = tpu.matmul %24, %26, %cst_21 {dimension_numbers = #tpu.dot_dimension_numbers<[1], [0], [0], [1], [0, 0, 1, 1], [], []>} : vector<256x128xf32>, vector<128x128xf32>, vector<256x128xf32> -> vector<256x128xf32>
    %c3 = arith.constant 3 : index
    %c0_22 = arith.constant 0 : index
    %c0_23 = arith.constant 0 : index
    %28 = vector.load %arg4[%c3, %c0_22, %c0_23] : memref<4x1x128xf32, #tpu.memory_space<vmem>>, vector<1x1x128xf32>
    %29 = vector.shape_cast %28 : vector<1x1x128xf32> to vector<1x128xf32>
    %30 = vector.broadcast %29 : vector<1x128xf32> to vector<256x128xf32>
    %31 = arith.addf %27, %30 : vector<256x128xf32>
    %32 = math.tanh %31 : vector<256x128xf32>
    %33 = vector.extract_strided_slice %2 {offsets = [0, 128], sizes = [256, 128], strides = [1, 1]} : vector<256x256xf32> to vector<256x128xf32>
    %34 = arith.addf %32, %33 : vector<256x128xf32>
    %c0_24 = arith.constant 0 : index
    %c0_25 = arith.constant 0 : index
    %35 = vector.load %arg5[%c0_24, %c0_25] : memref<256x128xf32, #tpu.memory_space<vmem>>, vector<256x128xf32>
    tpu.vector_store %arg5[%c0_24, %c0_25], %34 {strides = array<i32>} : memref<256x128xf32, #tpu.memory_space<vmem>>, vector<256x128xf32>,
    return
  }
  func.func @transform_0(%arg0: i32) -> (i32, i32) {
    %c0_i32 = arith.constant 0 : i32
    %c0_i32_0 = arith.constant 0 : i32
    return %arg0, %c0_i32 : i32, i32
  }
  func.func @transform_1(%arg0: i32) -> (i32, i32) {
    %c0_i32 = arith.constant 0 : i32
    %c0_i32_0 = arith.constant 0 : i32
    %c0_i32_1 = arith.constant 0 : i32
    return %c0_i32, %c0_i32_0 : i32, i32
  }
  func.func @transform_2(%arg0: i32) -> (i32, i32, i32) {
    %c0_i32 = arith.constant 0 : i32
    %c0_i32_0 = arith.constant 0 : i32
    %c0_i32_1 = arith.constant 0 : i32
    %c0_i32_2 = arith.constant 0 : i32
    return %c0_i32, %c0_i32_0, %c0_i32_1 : i32, i32, i32
  }
  func.func @transform_3(%arg0: i32) -> (i32, i32, i32) {
    %c0_i32 = arith.constant 0 : i32
    %c0_i32_0 = arith.constant 0 : i32
    %c0_i32_1 = arith.constant 0 : i32
    %c0_i32_2 = arith.constant 0 : i32
    return %c0_i32, %c0_i32_0, %c0_i32_1 : i32, i32, i32
  }
  func.func @transform_4(%arg0: i32) -> (i32, i32) {
    %c0_i32 = arith.constant 0 : i32
    %c0_i32_0 = arith.constant 0 : i32
    return %arg0, %c0_i32 : i32, i32
  }
}

</mosaic_0001>

<llo_original>
// kernel: tpu_custom_call.1
$region0: #{tpu_custom_call.1}
  #allocation0 [shape = 'u32[]', space=smem, size = 0x4, offset = 0x4, fixed_abs, tag = 'smem constant byte address 0x4 - core index']
  #allocation1 [shape = 'u32[72,128]{1,0:T(1,128)}', space=vmem, size = 0x9000, scoped, tag = 'internal scratch']
  %s0 = inlined_call_operand.vmem [shape: f32[256,16], index: 0, kind: input, shape index: {}]
  %s1 = inlined_call_operand.vmem [shape: f32[16,256], index: 1, kind: input, shape index: {}]
  %s2 = inlined_call_operand.hbm [shape: f32[3,128,128], index: 2, kind: input, shape index: {}]
  %s3 = inlined_call_operand.vmem [shape: f32[4,1,128], index: 3, kind: input, shape index: {}]
  %s4 = inlined_call_operand.hbm [shape: f32[256,128], index: 4, kind: output, shape index: {}]
  %s5 = sld [smem:[#allocation0]]
  $region30: #{tpu_custom_call.1} parent=0
    _
  %s7 = ssub.s32 1, %s5
  %s8 = scalar_select 0, %s7, %s5
  $region1: #{tpu_custom_call.1} parent=0
    #allocation2 [shape = 'u8[196608]{0}', space=vmem, size = 0x30000, scoped, tag = 'input window, operand 2, single buffered']
    #allocation3 [shape = 's32[1]{0}', space=sflag, size = 0x4, scoped, tag = 'scoped memory for tpu_custom_call.1']
    #allocation4 [shape = 's32[1]{0}', space=sflag, size = 0x4, scoped, tag = 'scoped memory for tpu_custom_call.1']
    #allocation5 [shape = 'u8[131072]{0}', space=vmem, size = 0x20000, scoped, tag = 'output window, operand 0, single buffered']
    %9 = vsyncpa [#allocation3], 0
    %10 = vsyncpa [#allocation4], 0
    // Predicated region
    $region2: #{tpu_custom_call.1} parent=1 // pred_check
      _
    $region3: #{tpu_custom_call.1} parent=1 // pred_check_branch
      %12 = sbr.rel (0) target = $region5
    $region4: #{tpu_custom_call.1} parent=1 // pred_region
      _
    $region5: #{tpu_custom_call.1} parent=1 // pred_fallthru
      _
    // Predicated region
    $region6: #{tpu_custom_call.1} parent=1 // pred_check
      _
    $region7: #{tpu_custom_call.1} parent=1 // pred_check_branch
      %14 = sbr.rel (0) target = $region9
    $region8: #{tpu_custom_call.1} parent=1 // pred_region
      _
    $region9: #{tpu_custom_call.1} parent=1 // pred_fallthru
      _
    // Predicated region
    $region10: #{tpu_custom_call.1} parent=1 // pred_check
      _
    $region11: #{tpu_custom_call.1} parent=1 // pred_check_branch
      %16 = sbr.rel (0) target = $region13
    $region12: #{tpu_custom_call.1} parent=1 // pred_region
      %18 = vsyncadd [#allocation3], 0
      %s19 = sshll.u32 %s2, 4
      %s20 = int_to_ptr.hbm [resolvable:$true] %s19
      %s21 = sshll.u32 [#allocation2], 4
      %s22 = int_to_ptr.vmem [resolvable:$true] %s21
      %27 = dma.hbm_to_vmem [thread:$0]  %s20, 6144, %s22, [#allocation3], 128, 128, 8
    $region13: #{tpu_custom_call.1} parent=1 // pred_fallthru
      _
    // Predicated region
    $region14: #{tpu_custom_call.1} parent=1 // pred_check
      _
    $region15: #{tpu_custom_call.1} parent=1 // pred_check_branch
      %29 = sbr.rel (0) target = $region17
    $region16: #{tpu_custom_call.1} parent=1 // pred_region
      _
    $region17: #{tpu_custom_call.1} parent=1 // pred_fallthru
      _
    // Predicated region
    $region18: #{tpu_custom_call.1} parent=1 // pred_check
      _
    $region19: #{tpu_custom_call.1} parent=1 // pred_check_branch
      %31 = sbr.rel (0) target = $region21
    $region20: #{tpu_custom_call.1} parent=1 // pred_region
      %33 = dma.done [#allocation3], 6144
    $region21: #{tpu_custom_call.1} parent=1 // pred_fallthru
      _
    %v34 = vld [vmem:[%s0] sm:$0xff]
    %v35 = vld [vmem:[%s0 + $0x8] sm:$0xff]
    %v36 = vld [vmem:[%s0 + $0x10] sm:$0xff]
    %v37 = vld [vmem:[%s0 + $0x18] sm:$0xff]
    %v38 = vld [vmem:[%s0 + $0x20] sm:$0xff]
    %v39 = vld [vmem:[%s0 + $0x28] sm:$0xff]
    %v40 = vld [vmem:[%s0 + $0x30] sm:$0xff]
    %v41 = vld [vmem:[%s0 + $0x38] sm:$0xff]
    %v42 = vld [vmem:[%s0 + $0x40] sm:$0xff]
    %v43 = vld [vmem:[%s0 + $0x48] sm:$0xff]
    %v44 = vld [vmem:[%s0 + $0x50] sm:$0xff]
    %v45 = vld [vmem:[%s0 + $0x58] sm:$0xff]
    %v46 = vld [vmem:[%s0 + $0x60] sm:$0xff]
    %v47 = vld [vmem:[%s0 + $0x68] sm:$0xff]
    %v48 = vld [vmem:[%s0 + $0x70] sm:$0xff]
    %v49 = vld [vmem:[%s0 + $0x78] sm:$0xff]
    %v50 = vld [vmem:[%s0 + $0x80] sm:$0xff]
    %v51 = vld [vmem:[%s0 + $0x88] sm:$0xff]
    %v52 = vld [vmem:[%s0 + $0x90] sm:$0xff]
    %v53 = vld [vmem:[%s0 + $0x98] sm:$0xff]
    %v54 = vld [vmem:[%s0 + $0xa0] sm:$0xff]
    %v55 = vld [vmem:[%s0 + $0xa8] sm:$0xff]
    %v56 = vld [vmem:[%s0 + $0xb0] sm:$0xff]
    %v57 = vld [vmem:[%s0 + $0xb8] sm:$0xff]
    %v58 = vld [vmem:[%s0 + $0xc0] sm:$0xff]
    %v59 = vld [vmem:[%s0 + $0xc8] sm:$0xff]
    %v60 = vld [vmem:[%s0 + $0xd0] sm:$0xff]
    %v61 = vld [vmem:[%s0 + $0xd8] sm:$0xff]
    %v62 = vld [vmem:[%s0 + $0xe0] sm:$0xff]
    %v63 = vld [vmem:[%s0 + $0xe8] sm:$0xff]
    %v64 = vld [vmem:[%s0 + $0xf0] sm:$0xff]
    %v65 = vld [vmem:[%s0 + $0xf8] sm:$0xff]
    %v66 = vld [vmem:[%s1] sm:$0xff]
    %v67 = vld [vmem:[%s1 + $0x8] sm:$0xff]
    %v68 = vld [vmem:[%s1 + $0x10] sm:$0xff]
    %v69 = vld [vmem:[%s1 + $0x18] sm:$0xff]
    %vm70 = vcmask 130048
    %v72 = vsel %vm70, %v34, 0
    %v75 = vsel %vm70, %v35, 0
    %v78 = vsel %vm70, %v36, 0
    %v81 = vsel %vm70, %v37, 0
    %v84 = vsel %vm70, %v38, 0
    %v87 = vsel %vm70, %v39, 0
    %v90 = vsel %vm70, %v40, 0
    %v93 = vsel %vm70, %v41, 0
    %v96 = vsel %vm70, %v42, 0
    %v99 = vsel %vm70, %v43, 0
    %v102 = vsel %vm70, %v44, 0
    %v105 = vsel %vm70, %v45, 0
    %v108 = vsel %vm70, %v46, 0
    %v111 = vsel %vm70, %v47, 0
    %v114 = vsel %vm70, %v48, 0
    %v117 = vsel %vm70, %v49, 0
    %v120 = vsel %vm70, %v50, 0
    %v123 = vsel %vm70, %v51, 0
    %v126 = vsel %vm70, %v52, 0
    %v129 = vsel %vm70, %v53, 0
    %v132 = vsel %vm70, %v54, 0
    %v135 = vsel %vm70, %v55, 0
    %v138 = vsel %vm70, %v56, 0
    %v141 = vsel %vm70, %v57, 0
    %v144 = vsel %vm70, %v58, 0
    %v147 = vsel %vm70, %v59, 0
    %v150 = vsel %vm70, %v60, 0
    %v153 = vsel %vm70, %v61, 0
    %v156 = vsel %vm70, %v62, 0
    %v159 = vsel %vm70, %v63, 0
    %v162 = vsel %vm70, %v64, 0
    %v165 = vsel %vm70, %v65, 0
    %167 = vmatpush.msra.mxu0 0.0
    %168 = vmatpush.msra.mxu0 0.0
    %169 = vmatpush.msra.mxu0 0.0
    %170 = vmatpush.msra.mxu0 0.0
    %171 = vmatpush.msra.mxu0 0.0
    %172 = vmatpush.msra.mxu0 0.0
    %173 = vmatpush.msra.mxu0 0.0
    %174 = vmatpush.msra.mxu0 0.0
    %175 = vmatpush.msra.mxu0 0.0
    %176 = vmatpush.msra.mxu0 0.0
    %177 = vmatpush.msra.mxu0 0.0
    %178 = vmatpush.msra.mxu0 0.0
    %179 = vmatpush.msra.mxu0 0.0
    %180 = vmatpush.msra.mxu0 0.0
    %181 = vmatpush.msra.mxu0 %v68
    %182 = vmatpush.msra.mxu0 %v66
    %183 = vmatmul.f32.gmra.mxu0 %v72
    %v184 = vpop.f32.mrf.mxu0
    %v185 = vadd.f32 0.0, %v184
    %186 = vmatmul.f32.gmra.mxu0 %v75
    %v187 = vpop.f32.mrf.mxu0
    %v188 = vadd.f32 0.0, %v187
    %189 = vmatmul.f32.gmra.mxu0 %v78
    %v190 = vpop.f32.mrf.mxu0
    %v191 = vadd.f32 0.0, %v190
    %192 = vmatmul.f32.gmra.mxu0 %v81
    %v193 = vpop.f32.mrf.mxu0
    %v194 = vadd.f32 0.0, %v193
    %195 = vmatmul.f32.gmra.mxu0 %v84
    %v196 = vpop.f32.mrf.mxu0
    %v197 = vadd.f32 0.0, %v196
    %198 = vmatmul.f32.gmra.mxu0 %v87
    %v199 = vpop.f32.mrf.mxu0
    %v200 = vadd.f32 0.0, %v199
    %201 = vmatmul.f32.gmra.mxu0 %v90
    %v202 = vpop.f32.mrf.mxu0
    %v203 = vadd.f32 0.0, %v202
    %204 = vmatmul.f32.gmra.mxu0 %v93
    %v205 = vpop.f32.mrf.mxu0
    %v206 = vadd.f32 0.0, %v205
    %207 = vmatmul.f32.gmra.mxu0 %v96
    %v208 = vpop.f32.mrf.mxu0
    %v209 = vadd.f32 0.0, %v208
    %210 = vmatmul.f32.gmra.mxu0 %v99
    %v211 = vpop.f32.mrf.mxu0
    %v212 = vadd.f32 0.0, %v211
    %213 = vmatmul.f32.gmra.mxu0 %v102
    %v214 = vpop.f32.mrf.mxu0
    %v215 = vadd.f32 0.0, %v214
    %216 = vmatmul.f32.gmra.mxu0 %v105
    %v217 = vpop.f32.mrf.mxu0
    %v218 = vadd.f32 0.0, %v217
    %219 = vmatmul.f32.gmra.mxu0 %v108
    %v220 = vpop.f32.mrf.mxu0
    %v221 = vadd.f32 0.0, %v220
    %222 = vmatmul.f32.gmra.mxu0 %v111
    %v223 = vpop.f32.mrf.mxu0
    %v224 = vadd.f32 0.0, %v223
    %225 = vmatmul.f32.gmra.mxu0 %v114
    %v226 = vpop.f32.mrf.mxu0
    %v227 = vadd.f32 0.0, %v226
    %228 = vmatmul.f32.gmra.mxu0 %v117
    %v229 = vpop.f32.mrf.mxu0
    %v230 = vadd.f32 0.0, %v229
    %231 = vmatmul.f32.gmra.mxu0 %v120
    %v232 = vpop.f32.mrf.mxu0
    %v233 = vadd.f32 0.0, %v232
    %234 = vmatmul.f32.gmra.mxu0 %v123
    %v235 = vpop.f32.mrf.mxu0
    %v236 = vadd.f32 0.0, %v235
    %237 = vmatmul.f32.gmra.mxu0 %v126
    %v238 = vpop.f32.mrf.mxu0
    %v239 = vadd.f32 0.0, %v238
    %240 = vmatmul.f32.gmra.mxu0 %v129
    %v241 = vpop.f32.mrf.mxu0
    %v242 = vadd.f32 0.0, %v241
    %243 = vmatmul.f32.gmra.mxu0 %v132
    %v244 = vpop.f32.mrf.mxu0
    %v245 = vadd.f32 0.0, %v244
    %246 = vmatmul.f32.gmra.mxu0 %v135
    %v247 = vpop.f32.mrf.mxu0
    %v248 = vadd.f32 0.0, %v247
    %249 = vmatmul.f32.gmra.mxu0 %v138
    %v250 = vpop.f32.mrf.mxu0
    %v251 = vadd.f32 0.0, %v250
    %252 = vmatmul.f32.gmra.mxu0 %v141
    %v253 = vpop.f32.mrf.mxu0
    %v254 = vadd.f32 0.0, %v253
    %255 = vmatmul.f32.gmra.mxu0 %v144
    %v256 = vpop.f32.mrf.mxu0
    %v257 = vadd.f32 0.0, %v256
    %258 = vmatmul.f32.gmra.mxu0 %v147
    %v259 = vpop.f32.mrf.mxu0
    %v260 = vadd.f32 0.0, %v259
    %261 = vmatmul.f32.gmra.mxu0 %v150
    %v262 = vpop.f32.mrf.mxu0
    %v263 = vadd.f32 0.0, %v262
    %264 = vmatmul.f32.gmra.mxu0 %v153
    %v265 = vpop.f32.mrf.mxu0
    %v266 = vadd.f32 0.0, %v265
    %267 = vmatmul.f32.gmra.mxu0 %v156
    %v268 = vpop.f32.mrf.mxu0
    %v269 = vadd.f32 0.0, %v268
    %270 = vmatmul.f32.gmra.mxu0 %v159
    %v271 = vpop.f32.mrf.mxu0
    %v272 = vadd.f32 0.0, %v271
    %273 = vmatmul.f32.gmra.mxu0 %v162
    %v274 = vpop.f32.mrf.mxu0
    %v275 = vadd.f32 0.0, %v274
    %276 = vmatmul.f32.gmra.mxu0 %v165
    %v277 = vpop.f32.mrf.mxu0
    %v278 = vadd.f32 0.0, %v277
    %279 = vdwg.mxu0
    %280 = vmatpush.msra.mxu0 0.0
    %281 = vmatpush.msra.mxu0 0.0
    %282 = vmatpush.msra.mxu0 0.0
    %283 = vmatpush.msra.mxu0 0.0
    %284 = vmatpush.msra.mxu0 0.0
    %285 = vmatpush.msra.mxu0 0.0
    %286 = vmatpush.msra.mxu0 0.0
    %287 = vmatpush.msra.mxu0 0.0
    %288 = vmatpush.msra.mxu0 0.0
    %289 = vmatpush.msra.mxu0 0.0
    %290 = vmatpush.msra.mxu0 0.0
    %291 = vmatpush.msra.mxu0 0.0
    %292 = vmatpush.msra.mxu0 0.0
    %293 = vmatpush.msra.mxu0 0.0
    %294 = vmatpush.msra.mxu0 %v69
    %295 = vmatpush.msra.mxu0 %v67
    %296 = vmatmul.f32.gmra.mxu0 %v72
    %v297 = vpop.f32.mrf.mxu0
    %v298 = vadd.f32 0.0, %v297
    %299 = vmatmul.f32.gmra.mxu0 %v75
    %v300 = vpop.f32.mrf.mxu0
    %v301 = vadd.f32 0.0, %v300
    %302 = vmatmul.f32.gmra.mxu0 %v78
    %v303 = vpop.f32.mrf.mxu0
    %v304 = vadd.f32 0.0, %v303
    %305 = vmatmul.f32.gmra.mxu0 %v81
    %v306 = vpop.f32.mrf.mxu0
    %v307 = vadd.f32 0.0, %v306
    %308 = vmatmul.f32.gmra.mxu0 %v84
    %v309 = vpop.f32.mrf.mxu0
    %v310 = vadd.f32 0.0, %v309
    %311 = vmatmul.f32.gmra.mxu0 %v87
    %v312 = vpop.f32.mrf.mxu0
    %v313 = vadd.f32 0.0, %v312
    %314 = vmatmul.f32.gmra.mxu0 %v90
    %v315 = vpop.f32.mrf.mxu0
    %v316 = vadd.f32 0.0, %v315
    %317 = vmatmul.f32.gmra.mxu0 %v93
    %v318 = vpop.f32.mrf.mxu0
    %v319 = vadd.f32 0.0, %v318
    %320 = vmatmul.f32.gmra.mxu0 %v96
    %v321 = vpop.f32.mrf.mxu0
    %v322 = vadd.f32 0.0, %v321
    %323 = vmatmul.f32.gmra.mxu0 %v99
    %v324 = vpop.f32.mrf.mxu0
    %v325 = vadd.f32 0.0, %v324
    %326 = vmatmul.f32.gmra.mxu0 %v102
    %v327 = vpop.f32.mrf.mxu0
    %v328 = vadd.f32 0.0, %v327
    %329 = vmatmul.f32.gmra.mxu0 %v105
    %v330 = vpop.f32.mrf.mxu0
    %v331 = vadd.f32 0.0, %v330
    %332 = vmatmul.f32.gmra.mxu0 %v108
    %v333 = vpop.f32.mrf.mxu0
    %v334 = vadd.f32 0.0, %v333
    %335 = vmatmul.f32.gmra.mxu0 %v111
    %v336 = vpop.f32.mrf.mxu0
    %v337 = vadd.f32 0.0, %v336
    %338 = vmatmul.f32.gmra.mxu0 %v114
    %v339 = vpop.f32.mrf.mxu0
    %v340 = vadd.f32 0.0, %v339
    %341 = vmatmul.f32.gmra.mxu0 %v117
    %v342 = vpop.f32.mrf.mxu0
    %v343 = vadd.f32 0.0, %v342
    %344 = vmatmul.f32.gmra.mxu0 %v120
    %v345 = vpop.f32.mrf.mxu0
    %v346 = vadd.f32 0.0, %v345
    %347 = vmatmul.f32.gmra.mxu0 %v123
    %v348 = vpop.f32.mrf.mxu0
    %v349 = vadd.f32 0.0, %v348
    %350 = vmatmul.f32.gmra.mxu0 %v126
    %v351 = vpop.f32.mrf.mxu0
    %v352 = vadd.f32 0.0, %v351
    %353 = vmatmul.f32.gmra.mxu0 %v129
    %v354 = vpop.f32.mrf.mxu0
    %v355 = vadd.f32 0.0, %v354
    %356 = vmatmul.f32.gmra.mxu0 %v132
    %v357 = vpop.f32.mrf.mxu0
    %v358 = vadd.f32 0.0, %v357
    %359 = vmatmul.f32.gmra.mxu0 %v135
    %v360 = vpop.f32.mrf.mxu0
    %v361 = vadd.f32 0.0, %v360
    %362 = vmatmul.f32.gmra.mxu0 %v138
    %v363 = vpop.f32.mrf.mxu0
    %v364 = vadd.f32 0.0, %v363
    %365 = vmatmul.f32.gmra.mxu0 %v141
    %v366 = vpop.f32.mrf.mxu0
    %v367 = vadd.f32 0.0, %v366
    %368 = vmatmul.f32.gmra.mxu0 %v144
    %v369 = vpop.f32.mrf.mxu0
    %v370 = vadd.f32 0.0, %v369
    %371 = vmatmul.f32.gmra.mxu0 %v147
    %v372 = vpop.f32.mrf.mxu0
    %v373 = vadd.f32 0.0, %v372
    %374 = vmatmul.f32.gmra.mxu0 %v150
    %v375 = vpop.f32.mrf.mxu0
    %v376 = vadd.f32 0.0, %v375
    %377 = vmatmul.f32.gmra.mxu0 %v153
    %v378 = vpop.f32.mrf.mxu0
    %v379 = vadd.f32 0.0, %v378
    %380 = vmatmul.f32.gmra.mxu0 %v156
    %v381 = vpop.f32.mrf.mxu0
    %v382 = vadd.f32 0.0, %v381
    %383 = vmatmul.f32.gmra.mxu0 %v159
    %v384 = vpop.f32.mrf.mxu0
    %v385 = vadd.f32 0.0, %v384
    %386 = vmatmul.f32.gmra.mxu0 %v162
    %v387 = vpop.f32.mrf.mxu0
    %v388 = vadd.f32 0.0, %v387
    %389 = vmatmul.f32.gmra.mxu0 %v165
    %v390 = vpop.f32.mrf.mxu0
    %v391 = vadd.f32 0.0, %v390
    %392 = vdwg.mxu0
    %v393 = vld [vmem:[%s3] sm:$0x1]
    %v395 = vperm.slane %v393, 0
    %v397 = vadd.f32 %v185, %v395
    %v398 = vadd.f32 %v188, %v395
    %v399 = vadd.f32 %v191, %v395
    %v400 = vadd.f32 %v194, %v395
    %v401 = vadd.f32 %v197, %v395
    %v402 = vadd.f32 %v200, %v395
    %v403 = vadd.f32 %v203, %v395
    %v404 = vadd.f32 %v206, %v395
    %v405 = vadd.f32 %v209, %v395
    %v406 = vadd.f32 %v212, %v395
    %v407 = vadd.f32 %v215, %v395
    %v408 = vadd.f32 %v218, %v395
    %v409 = vadd.f32 %v221, %v395
    %v410 = vadd.f32 %v224, %v395
    %v411 = vadd.f32 %v227, %v395
    %v412 = vadd.f32 %v230, %v395
    %v413 = vadd.f32 %v233, %v395
    %v414 = vadd.f32 %v236, %v395
    %v415 = vadd.f32 %v239, %v395
    %v416 = vadd.f32 %v242, %v395
    %v417 = vadd.f32 %v245, %v395
    %v418 = vadd.f32 %v248, %v395
    %v419 = vadd.f32 %v251, %v395
    %v420 = vadd.f32 %v254, %v395
    %v421 = vadd.f32 %v257, %v395
    %v422 = vadd.f32 %v260, %v395
    %v423 = vadd.f32 %v263, %v395
    %v424 = vadd.f32 %v266, %v395
    %v425 = vadd.f32 %v269, %v395
    %v426 = vadd.f32 %v272, %v395
    %v427 = vadd.f32 %v275, %v395
    %v428 = vadd.f32 %v278, %v395
    %v429 = vtanh.pop %v397
    %v430 = vtanh.pop %v398
    %v431 = vtanh.pop %v399
    %v432 = vtanh.pop %v400
    %v433 = vtanh.pop %v401
    %v434 = vtanh.pop %v402
    %v435 = vtanh.pop %v403
    %v436 = vtanh.pop %v404
    %v437 = vtanh.pop %v405
    %v438 = vtanh.pop %v406
    %v439 = vtanh.pop %v407
    %v440 = vtanh.pop %v408
    %v441 = vtanh.pop %v409
    %v442 = vtanh.pop %v410
    %v443 = vtanh.pop %v411
    %v444 = vtanh.pop %v412
    %v445 = vtanh.pop %v413
    %v446 = vtanh.pop %v414
    %v447 = vtanh.pop %v415
    %v448 = vtanh.pop %v416
    %v449 = vtanh.pop %v417
    %v450 = vtanh.pop %v418
    %v451 = vtanh.pop %v419
    %v452 = vtanh.pop %v420
    %v453 = vtanh.pop %v421
    %v454 = vtanh.pop %v422
    %v455 = vtanh.pop %v423
    %v456 = vtanh.pop %v424
    %v457 = vtanh.pop %v425
    %v458 = vtanh.pop %v426
    %v459 = vtanh.pop %v427
    %v460 = vtanh.pop %v428
    %v461 = vld [vmem:[#allocation2] sm:$0xff]
    %v462 = vld [vmem:[#allocation2 + $0x8] sm:$0xff]
    %v463 = vld [vmem:[#allocation2 + $0x10] sm:$0xff]
    %v464 = vld [vmem:[#allocation2 + $0x18] sm:$0xff]
    %v465 = vld [vmem:[#allocation2 + $0x20] sm:$0xff]
    %v466 = vld [vmem:[#allocation2 + $0x28] sm:$0xff]
    %v467 = vld [vmem:[#allocation2 + $0x30] sm:$0xff]
    %v468 = vld [vmem:[#allocation2 + $0x38] sm:$0xff]
    %v469 = vld [vmem:[#allocation2 + $0x40] sm:$0xff]
    %v470 = vld [vmem:[#allocation2 + $0x48] sm:$0xff]
    %v471 = vld [vmem:[#allocation2 + $0x50] sm:$0xff]
    %v472 = vld [vmem:[#allocation2 + $0x58] sm:$0xff]
    %v473 = vld [vmem:[#allocation2 + $0x60] sm:$0xff]
    %v474 = vld [vmem:[#allocation2 + $0x68] sm:$0xff]
    %v475 = vld [vmem:[#allocation2 + $0x70] sm:$0xff]
    %v476 = vld [vmem:[#allocation2 + $0x78] sm:$0xff]
    %s477 = scalar_lea.vmem %s3, 1
    %v478 = vld [vmem:[%s477] sm:$0x1]
    %v480 = vperm.slane %v478, 0
    %482 = vmatpush.msra.mxu0 %v476
    %483 = vmatpush.msra.mxu0 %v475
    %484 = vmatpush.msra.mxu0 %v474
    %485 = vmatpush.msra.mxu0 %v473
    %486 = vmatpush.msra.mxu0 %v472
    %487 = vmatpush.msra.mxu0 %v471
    %488 = vmatpush.msra.mxu0 %v470
    %489 = vmatpush.msra.mxu0 %v469
    %490 = vmatpush.msra.mxu0 %v468
    %491 = vmatpush.msra.mxu0 %v467
    %492 = vmatpush.msra.mxu0 %v466
    %493 = vmatpush.msra.mxu0 %v465
    %494 = vmatpush.msra.mxu0 %v464
    %495 = vmatpush.msra.mxu0 %v463
    %496 = vmatpush.msra.mxu0 %v462
    %497 = vmatpush.msra.mxu0 %v461
    %498 = vmatmul.f32.gmra.mxu0 %v429
    %v499 = vpop.f32.mrf.mxu0
    %v500 = vadd.f32 %v480, %v499
    %501 = vmatmul.f32.gmra.mxu0 %v430
    %v502 = vpop.f32.mrf.mxu0
    %v503 = vadd.f32 %v480, %v502
    %504 = vmatmul.f32.gmra.mxu0 %v431
    %v505 = vpop.f32.mrf.mxu0
    %v506 = vadd.f32 %v480, %v505
    %507 = vmatmul.f32.gmra.mxu0 %v432
    %v508 = vpop.f32.mrf.mxu0
    %v509 = vadd.f32 %v480, %v508
    %510 = vmatmul.f32.gmra.mxu0 %v433
    %v511 = vpop.f32.mrf.mxu0
    %v512 = vadd.f32 %v480, %v511
    %513 = vmatmul.f32.gmra.mxu0 %v434
    %v514 = vpop.f32.mrf.mxu0
    %v515 = vadd.f32 %v480, %v514
    %516 = vmatmul.f32.gmra.mxu0 %v435
    %v517 = vpop.f32.mrf.mxu0
    %v518 = vadd.f32 %v480, %v517
    %519 = vmatmul.f32.gmra.mxu0 %v436
    %v520 = vpop.f32.mrf.mxu0
    %v521 = vadd.f32 %v480, %v520
    %522 = vmatmul.f32.gmra.mxu0 %v437
    %v523 = vpop.f32.mrf.mxu0
    %v524 = vadd.f32 %v480, %v523
    %525 = vmatmul.f32.gmra.mxu0 %v438
    %v526 = vpop.f32.mrf.mxu0
    %v527 = vadd.f32 %v480, %v526
    %528 = vmatmul.f32.gmra.mxu0 %v439
    %v529 = vpop.f32.mrf.mxu0
    %v530 = vadd.f32 %v480, %v529
    %531 = vmatmul.f32.gmra.mxu0 %v440
    %v532 = vpop.f32.mrf.mxu0
    %v533 = vadd.f32 %v480, %v532
    %534 = vmatmul.f32.gmra.mxu0 %v441
    %v535 = vpop.f32.mrf.mxu0
    %v536 = vadd.f32 %v480, %v535
    %537 = vmatmul.f32.gmra.mxu0 %v442
    %v538 = vpop.f32.mrf.mxu0
    %v539 = vadd.f32 %v480, %v538
    %540 = vmatmul.f32.gmra.mxu0 %v443
    %v541 = vpop.f32.mrf.mxu0
    %v542 = vadd.f32 %v480, %v541
    %543 = vmatmul.f32.gmra.mxu0 %v444
    %v544 = vpop.f32.mrf.mxu0
    %v545 = vadd.f32 %v480, %v544
    %546 = vmatmul.f32.gmra.mxu0 %v445
    %v547 = vpop.f32.mrf.mxu0
    %v548 = vadd.f32 %v480, %v547
    %549 = vmatmul.f32.gmra.mxu0 %v446
    %v550 = vpop.f32.mrf.mxu0
    %v551 = vadd.f32 %v480, %v550
    %552 = vmatmul.f32.gmra.mxu0 %v447
    %v553 = vpop.f32.mrf.mxu0
    %v554 = vadd.f32 %v480, %v553
    %555 = vmatmul.f32.gmra.mxu0 %v448
    %v556 = vpop.f32.mrf.mxu0
    %v557 = vadd.f32 %v480, %v556
    %558 = vmatmul.f32.gmra.mxu0 %v449
    %v559 = vpop.f32.mrf.mxu0
    %v560 = vadd.f32 %v480, %v559
    %561 = vmatmul.f32.gmra.mxu0 %v450
    %v562 = vpop.f32.mrf.mxu0
    %v563 = vadd.f32 %v480, %v562
    %564 = vmatmul.f32.gmra.mxu0 %v451
    %v565 = vpop.f32.mrf.mxu0
    %v566 = vadd.f32 %v480, %v565
    %567 = vmatmul.f32.gmra.mxu0 %v452
    %v568 = vpop.f32.mrf.mxu0
    %v569 = vadd.f32 %v480, %v568
    %570 = vmatmul.f32.gmra.mxu0 %v453
    %v571 = vpop.f32.mrf.mxu0
    %v572 = vadd.f32 %v480, %v571
    %573 = vmatmul.f32.gmra.mxu0 %v454
    %v574 = vpop.f32.mrf.mxu0
    %v575 = vadd.f32 %v480, %v574
    %576 = vmatmul.f32.gmra.mxu0 %v455
    %v577 = vpop.f32.mrf.mxu0
    %v578 = vadd.f32 %v480, %v577
    %579 = vmatmul.f32.gmra.mxu0 %v456
    %v580 = vpop.f32.mrf.mxu0
    %v581 = vadd.f32 %v480, %v580
    %582 = vmatmul.f32.gmra.mxu0 %v457
    %v583 = vpop.f32.mrf.mxu0
    %v584 = vadd.f32 %v480, %v583
    %585 = vmatmul.f32.gmra.mxu0 %v458
    %v586 = vpop.f32.mrf.mxu0
    %v587 = vadd.f32 %v480, %v586
    %588 = vmatmul.f32.gmra.mxu0 %v459
    %v589 = vpop.f32.mrf.mxu0
    %v590 = vadd.f32 %v480, %v589
    %591 = vmatmul.f32.gmra.mxu0 %v460
    %v592 = vpop.f32.mrf.mxu0
    %v593 = vadd.f32 %v480, %v592
    %594 = vdwg.mxu0
    %v595 = vtanh.pop %v500
    %v596 = vtanh.pop %v503
    %v597 = vtanh.pop %v506
    %v598 = vtanh.pop %v509
    %v599 = vtanh.pop %v512
    %v600 = vtanh.pop %v515
    %v601 = vtanh.pop %v518
    %v602 = vtanh.pop %v521
    %v603 = vtanh.pop %v524
    %v604 = vtanh.pop %v527
    %v605 = vtanh.pop %v530
    %v606 = vtanh.pop %v533
    %v607 = vtanh.pop %v536
    %v608 = vtanh.pop %v539
    %v609 = vtanh.pop %v542
    %v610 = vtanh.pop %v545
    %v611 = vtanh.pop %v548
    %v612 = vtanh.pop %v551
    %v613 = vtanh.pop %v554
    %v614 = vtanh.pop %v557
    %v615 = vtanh.pop %v560
    %v616 = vtanh.pop %v563
    %v617 = vtanh.pop %v566
    %v618 = vtanh.pop %v569
    %v619 = vtanh.pop %v572
    %v620 = vtanh.pop %v575
    %v621 = vtanh.pop %v578
    %v622 = vtanh.pop %v581
    %v623 = vtanh.pop %v584
    %v624 = vtanh.pop %v587
    %v625 = vtanh.pop %v590
    %v626 = vtanh.pop %v593
    %s627 = scalar_lea.vmem [#allocation2], 128
    %v628 = vld [vmem:[%s627] sm:$0xff]
    %v629 = vld [vmem:[%s627 + $0x8] sm:$0xff]
    %v630 = vld [vmem:[%s627 + $0x10] sm:$0xff]
    %v631 = vld [vmem:[%s627 + $0x18] sm:$0xff]
    %v632 = vld [vmem:[%s627 + $0x20] sm:$0xff]
    %v633 = vld [vmem:[%s627 + $0x28] sm:$0xff]
    %v634 = vld [vmem:[%s627 + $0x30] sm:$0xff]
    %v635 = vld [vmem:[%s627 + $0x38] sm:$0xff]
    %v636 = vld [vmem:[%s627 + $0x40] sm:$0xff]
    %v637 = vld [vmem:[%s627 + $0x48] sm:$0xff]
    %v638 = vld [vmem:[%s627 + $0x50] sm:$0xff]
    %v639 = vld [vmem:[%s627 + $0x58] sm:$0xff]
    %v640 = vld [vmem:[%s627 + $0x60] sm:$0xff]
    %v641 = vld [vmem:[%s627 + $0x68] sm:$0xff]
    %v642 = vld [vmem:[%s627 + $0x70] sm:$0xff]
    %v643 = vld [vmem:[%s627 + $0x78] sm:$0xff]
    %s644 = scalar_lea.vmem %s3, 2
    %v645 = vld [vmem:[%s644] sm:$0x1]
    %v647 = vperm.slane %v645, 0
    %649 = vmatpush.msra.mxu0 %v643
    %650 = vmatpush.msra.mxu0 %v642
    %651 = vmatpush.msra.mxu0 %v641
    %652 = vmatpush.msra.mxu0 %v640
    %653 = vmatpush.msra.mxu0 %v639
    %654 = vmatpush.msra.mxu0 %v638
    %655 = vmatpush.msra.mxu0 %v637
    %656 = vmatpush.msra.mxu0 %v636
    %657 = vmatpush.msra.mxu0 %v635
    %658 = vmatpush.msra.mxu0 %v634
    %659 = vmatpush.msra.mxu0 %v633
    %660 = vmatpush.msra.mxu0 %v632
    %661 = vmatpush.msra.mxu0 %v631
    %662 = vmatpush.msra.mxu0 %v630
    %663 = vmatpush.msra.mxu0 %v629
    %664 = vmatpush.msra.mxu0 %v628
    %665 = vmatmul.f32.gmra.mxu0 %v595
    %v666 = vpop.f32.mrf.mxu0
    %v667 = vadd.f32 %v647, %v666
    %668 = vmatmul.f32.gmra.mxu0 %v596
    %v669 = vpop.f32.mrf.mxu0
    %v670 = vadd.f32 %v647, %v669
    %671 = vmatmul.f32.gmra.mxu0 %v597
    %v672 = vpop.f32.mrf.mxu0
    %v673 = vadd.f32 %v647, %v672
    %674 = vmatmul.f32.gmra.mxu0 %v598
    %v675 = vpop.f32.mrf.mxu0
    %v676 = vadd.f32 %v647, %v675
    %677 = vmatmul.f32.gmra.mxu0 %v599
    %v678 = vpop.f32.mrf.mxu0
    %v679 = vadd.f32 %v647, %v678
    %680 = vmatmul.f32.gmra.mxu0 %v600
    %v681 = vpop.f32.mrf.mxu0
    %v682 = vadd.f32 %v647, %v681
    %683 = vmatmul.f32.gmra.mxu0 %v601
    %v684 = vpop.f32.mrf.mxu0
    %v685 = vadd.f32 %v647, %v684
    %686 = vmatmul.f32.gmra.mxu0 %v602
    %v687 = vpop.f32.mrf.mxu0
    %v688 = vadd.f32 %v647, %v687
    %689 = vmatmul.f32.gmra.mxu0 %v603
    %v690 = vpop.f32.mrf.mxu0
    %v691 = vadd.f32 %v647, %v690
    %692 = vmatmul.f32.gmra.mxu0 %v604
    %v693 = vpop.f32.mrf.mxu0
    %v694 = vadd.f32 %v647, %v693
    %695 = vmatmul.f32.gmra.mxu0 %v605
    %v696 = vpop.f32.mrf.mxu0
    %v697 = vadd.f32 %v647, %v696
    %698 = vmatmul.f32.gmra.mxu0 %v606
    %v699 = vpop.f32.mrf.mxu0
    %v700 = vadd.f32 %v647, %v699
    %701 = vmatmul.f32.gmra.mxu0 %v607
    %v702 = vpop.f32.mrf.mxu0
    %v703 = vadd.f32 %v647, %v702
    %704 = vmatmul.f32.gmra.mxu0 %v608
    %v705 = vpop.f32.mrf.mxu0
    %v706 = vadd.f32 %v647, %v705
    %707 = vmatmul.f32.gmra.mxu0 %v609
    %v708 = vpop.f32.mrf.mxu0
    %v709 = vadd.f32 %v647, %v708
    %710 = vmatmul.f32.gmra.mxu0 %v610
    %v711 = vpop.f32.mrf.mxu0
    %v712 = vadd.f32 %v647, %v711
    %713 = vmatmul.f32.gmra.mxu0 %v611
    %v714 = vpop.f32.mrf.mxu0
    %v715 = vadd.f32 %v647, %v714
    %716 = vmatmul.f32.gmra.mxu0 %v612
    %v717 = vpop.f32.mrf.mxu0
    %v718 = vadd.f32 %v647, %v717
    %719 = vmatmul.f32.gmra.mxu0 %v613
    %v720 = vpop.f32.mrf.mxu0
    %v721 = vadd.f32 %v647, %v720
    %722 = vmatmul.f32.gmra.mxu0 %v614
    %v723 = vpop.f32.mrf.mxu0
    %v724 = vadd.f32 %v647, %v723
    %725 = vmatmul.f32.gmra.mxu0 %v615
    %v726 = vpop.f32.mrf.mxu0
    %v727 = vadd.f32 %v647, %v726
    %728 = vmatmul.f32.gmra.mxu0 %v616
    %v729 = vpop.f32.mrf.mxu0
    %v730 = vadd.f32 %v647, %v729
    %731 = vmatmul.f32.gmra.mxu0 %v617
    %v732 = vpop.f32.mrf.mxu0
    %v733 = vadd.f32 %v647, %v732
    %734 = vmatmul.f32.gmra.mxu0 %v618
    %v735 = vpop.f32.mrf.mxu0
    %v736 = vadd.f32 %v647, %v735
    %737 = vmatmul.f32.gmra.mxu0 %v619
    %v738 = vpop.f32.mrf.mxu0
    %v739 = vadd.f32 %v647, %v738
    %740 = vmatmul.f32.gmra.mxu0 %v620
    %v741 = vpop.f32.mrf.mxu0
    %v742 = vadd.f32 %v647, %v741
    %743 = vmatmul.f32.gmra.mxu0 %v621
    %v744 = vpop.f32.mrf.mxu0
    %v745 = vadd.f32 %v647, %v744
    %746 = vmatmul.f32.gmra.mxu0 %v622
    %v747 = vpop.f32.mrf.mxu0
    %v748 = vadd.f32 %v647, %v747
    %749 = vmatmul.f32.gmra.mxu0 %v623
    %v750 = vpop.f32.mrf.mxu0
    %v751 = vadd.f32 %v647, %v750
    %752 = vmatmul.f32.gmra.mxu0 %v624
    %v753 = vpop.f32.mrf.mxu0
    %v754 = vadd.f32 %v647, %v753
    %755 = vmatmul.f32.gmra.mxu0 %v625
    %v756 = vpop.f32.mrf.mxu0
    %v757 = vadd.f32 %v647, %v756
    %758 = vmatmul.f32.gmra.mxu0 %v626
    %v759 = vpop.f32.mrf.mxu0
    %v760 = vadd.f32 %v647, %v759
    %761 = vdwg.mxu0
    %v762 = vtanh.pop %v667
    %v763 = vtanh.pop %v670
    %v764 = vtanh.pop %v673
    %v765 = vtanh.pop %v676
    %v766 = vtanh.pop %v679
    %v767 = vtanh.pop %v682
    %v768 = vtanh.pop %v685
    %v769 = vtanh.pop %v688
    %v770 = vtanh.pop %v691
    %v771 = vtanh.pop %v694
    %v772 = vtanh.pop %v697
    %v773 = vtanh.pop %v700
    %v774 = vtanh.pop %v703
    %v775 = vtanh.pop %v706
    %v776 = vtanh.pop %v709
    %v777 = vtanh.pop %v712
    %v778 = vtanh.pop %v715
    %v779 = vtanh.pop %v718
    %v780 = vtanh.pop %v721
    %v781 = vtanh.pop %v724
    %v782 = vtanh.pop %v727
    %v783 = vtanh.pop %v730
    %v784 = vtanh.pop %v733
    %v785 = vtanh.pop %v736
    %v786 = vtanh.pop %v739
    %v787 = vtanh.pop %v742
    %v788 = vtanh.pop %v745
    %v789 = vtanh.pop %v748
    %v790 = vtanh.pop %v751
    %v791 = vtanh.pop %v754
    %v792 = vtanh.pop %v757
    %v793 = vtanh.pop %v760
    %s794 = scalar_lea.vmem [#allocation2], 256
    %v795 = vld [vmem:[%s794] sm:$0xff]
    %v796 = vld [vmem:[%s794 + $0x8] sm:$0xff]
    %v797 = vld [vmem:[%s794 + $0x10] sm:$0xff]
    %v798 = vld [vmem:[%s794 + $0x18] sm:$0xff]
    %v799 = vld [vmem:[%s794 + $0x20] sm:$0xff]
    %v800 = vld [vmem:[%s794 + $0x28] sm:$0xff]
    %v801 = vld [vmem:[%s794 + $0x30] sm:$0xff]
    %v802 = vld [vmem:[%s794 + $0x38] sm:$0xff]
    %v803 = vld [vmem:[%s794 + $0x40] sm:$0xff]
    %v804 = vld [vmem:[%s794 + $0x48] sm:$0xff]
    %v805 = vld [vmem:[%s794 + $0x50] sm:$0xff]
    %v806 = vld [vmem:[%s794 + $0x58] sm:$0xff]
    %v807 = vld [vmem:[%s794 + $0x60] sm:$0xff]
    %v808 = vld [vmem:[%s794 + $0x68] sm:$0xff]
    %v809 = vld [vmem:[%s794 + $0x70] sm:$0xff]
    %v810 = vld [vmem:[%s794 + $0x78] sm:$0xff]
    %s811 = scalar_lea.vmem %s3, 3
    %v812 = vld [vmem:[%s811] sm:$0x1]
    %v814 = vperm.slane %v812, 0
    %816 = vmatpush.msra.mxu0 %v810
    %817 = vmatpush.msra.mxu0 %v809
    %818 = vmatpush.msra.mxu0 %v808
    %819 = vmatpush.msra.mxu0 %v807
    %820 = vmatpush.msra.mxu0 %v806
    %821 = vmatpush.msra.mxu0 %v805
    %822 = vmatpush.msra.mxu0 %v804
    %823 = vmatpush.msra.mxu0 %v803
    %824 = vmatpush.msra.mxu0 %v802
    %825 = vmatpush.msra.mxu0 %v801
    %826 = vmatpush.msra.mxu0 %v800
    %827 = vmatpush.msra.mxu0 %v799
    %828 = vmatpush.msra.mxu0 %v798
    %829 = vmatpush.msra.mxu0 %v797
    %830 = vmatpush.msra.mxu0 %v796
    %831 = vmatpush.msra.mxu0 %v795
    %832 = vmatmul.f32.gmra.mxu0 %v762
    %v833 = vpop.f32.mrf.mxu0
    %v834 = vadd.f32 %v814, %v833
    %835 = vmatmul.f32.gmra.mxu0 %v763
    %v836 = vpop.f32.mrf.mxu0
    %v837 = vadd.f32 %v814, %v836
    %838 = vmatmul.f32.gmra.mxu0 %v764
    %v839 = vpop.f32.mrf.mxu0
    %v840 = vadd.f32 %v814, %v839
    %841 = vmatmul.f32.gmra.mxu0 %v765
    %v842 = vpop.f32.mrf.mxu0
    %v843 = vadd.f32 %v814, %v842
    %844 = vmatmul.f32.gmra.mxu0 %v766
    %v845 = vpop.f32.mrf.mxu0
    %v846 = vadd.f32 %v814, %v845
    %847 = vmatmul.f32.gmra.mxu0 %v767
    %v848 = vpop.f32.mrf.mxu0
    %v849 = vadd.f32 %v814, %v848
    %850 = vmatmul.f32.gmra.mxu0 %v768
    %v851 = vpop.f32.mrf.mxu0
    %v852 = vadd.f32 %v814, %v851
    %853 = vmatmul.f32.gmra.mxu0 %v769
    %v854 = vpop.f32.mrf.mxu0
    %v855 = vadd.f32 %v814, %v854
    %856 = vmatmul.f32.gmra.mxu0 %v770
    %v857 = vpop.f32.mrf.mxu0
    %v858 = vadd.f32 %v814, %v857
    %859 = vmatmul.f32.gmra.mxu0 %v771
    %v860 = vpop.f32.mrf.mxu0
    %v861 = vadd.f32 %v814, %v860
    %862 = vmatmul.f32.gmra.mxu0 %v772
    %v863 = vpop.f32.mrf.mxu0
    %v864 = vadd.f32 %v814, %v863
    %865 = vmatmul.f32.gmra.mxu0 %v773
    %v866 = vpop.f32.mrf.mxu0
    %v867 = vadd.f32 %v814, %v866
    %868 = vmatmul.f32.gmra.mxu0 %v774
    %v869 = vpop.f32.mrf.mxu0
    %v870 = vadd.f32 %v814, %v869
    %871 = vmatmul.f32.gmra.mxu0 %v775
    %v872 = vpop.f32.mrf.mxu0
    %v873 = vadd.f32 %v814, %v872
    %874 = vmatmul.f32.gmra.mxu0 %v776
    %v875 = vpop.f32.mrf.mxu0
    %v876 = vadd.f32 %v814, %v875
    %877 = vmatmul.f32.gmra.mxu0 %v777
    %v878 = vpop.f32.mrf.mxu0
    %v879 = vadd.f32 %v814, %v878
    %880 = vmatmul.f32.gmra.mxu0 %v778
    %v881 = vpop.f32.mrf.mxu0
    %v882 = vadd.f32 %v814, %v881
    %883 = vmatmul.f32.gmra.mxu0 %v779
    %v884 = vpop.f32.mrf.mxu0
    %v885 = vadd.f32 %v814, %v884
    %886 = vmatmul.f32.gmra.mxu0 %v780
    %v887 = vpop.f32.mrf.mxu0
    %v888 = vadd.f32 %v814, %v887
    %889 = vmatmul.f32.gmra.mxu0 %v781
    %v890 = vpop.f32.mrf.mxu0
    %v891 = vadd.f32 %v814, %v890
    %892 = vmatmul.f32.gmra.mxu0 %v782
    %v893 = vpop.f32.mrf.mxu0
    %v894 = vadd.f32 %v814, %v893
    %895 = vmatmul.f32.gmra.mxu0 %v783
    %v896 = vpop.f32.mrf.mxu0
    %v897 = vadd.f32 %v814, %v896
    %898 = vmatmul.f32.gmra.mxu0 %v784
    %v899 = vpop.f32.mrf.mxu0
    %v900 = vadd.f32 %v814, %v899
    %901 = vmatmul.f32.gmra.mxu0 %v785
    %v902 = vpop.f32.mrf.mxu0
    %v903 = vadd.f32 %v814, %v902
    %904 = vmatmul.f32.gmra.mxu0 %v786
    %v905 = vpop.f32.mrf.mxu0
    %v906 = vadd.f32 %v814, %v905
    %907 = vmatmul.f32.gmra.mxu0 %v787
    %v908 = vpop.f32.mrf.mxu0
    %v909 = vadd.f32 %v814, %v908
    %910 = vmatmul.f32.gmra.mxu0 %v788
    %v911 = vpop.f32.mrf.mxu0
    %v912 = vadd.f32 %v814, %v911
    %913 = vmatmul.f32.gmra.mxu0 %v789
    %v914 = vpop.f32.mrf.mxu0
    %v915 = vadd.f32 %v814, %v914
    %916 = vmatmul.f32.gmra.mxu0 %v790
    %v917 = vpop.f32.mrf.mxu0
    %v918 = vadd.f32 %v814, %v917
    %919 = vmatmul.f32.gmra.mxu0 %v791
    %v920 = vpop.f32.mrf.mxu0
    %v921 = vadd.f32 %v814, %v920
    %922 = vmatmul.f32.gmra.mxu0 %v792
    %v923 = vpop.f32.mrf.mxu0
    %v924 = vadd.f32 %v814, %v923
    %925 = vmatmul.f32.gmra.mxu0 %v793
    %v926 = vpop.f32.mrf.mxu0
    %v927 = vadd.f32 %v814, %v926
    %928 = vdwg.mxu0
    %v929 = vtanh.pop %v834
    %v930 = vtanh.pop %v837
    %v931 = vtanh.pop %v840
    %v932 = vtanh.pop %v843
    %v933 = vtanh.pop %v846
    %v934 = vtanh.pop %v849
    %v935 = vtanh.pop %v852
    %v936 = vtanh.pop %v855
    %v937 = vtanh.pop %v858
    %v938 = vtanh.pop %v861
    %v939 = vtanh.pop %v864
    %v940 = vtanh.pop %v867
    %v941 = vtanh.pop %v870
    %v942 = vtanh.pop %v873
    %v943 = vtanh.pop %v876
    %v944 = vtanh.pop %v879
    %v945 = vtanh.pop %v882
    %v946 = vtanh.pop %v885
    %v947 = vtanh.pop %v888
    %v948 = vtanh.pop %v891
    %v949 = vtanh.pop %v894
    %v950 = vtanh.pop %v897
    %v951 = vtanh.pop %v900
    %v952 = vtanh.pop %v903
    %v953 = vtanh.pop %v906
    %v954 = vtanh.pop %v909
    %v955 = vtanh.pop %v912
    %v956 = vtanh.pop %v915
    %v957 = vtanh.pop %v918
    %v958 = vtanh.pop %v921
    %v959 = vtanh.pop %v924
    %v960 = vtanh.pop %v927
    %v961 = vadd.f32 %v929, %v298
    %v962 = vadd.f32 %v930, %v301
    %v963 = vadd.f32 %v931, %v304
    %v964 = vadd.f32 %v932, %v307
    %v965 = vadd.f32 %v933, %v310
    %v966 = vadd.f32 %v934, %v313
    %v967 = vadd.f32 %v935, %v316
    %v968 = vadd.f32 %v936, %v319
    %v969 = vadd.f32 %v937, %v322
    %v970 = vadd.f32 %v938, %v325
    %v971 = vadd.f32 %v939, %v328
    %v972 = vadd.f32 %v940, %v331
    %v973 = vadd.f32 %v941, %v334
    %v974 = vadd.f32 %v942, %v337
    %v975 = vadd.f32 %v943, %v340
    %v976 = vadd.f32 %v944, %v343
    %v977 = vadd.f32 %v945, %v346
    %v978 = vadd.f32 %v946, %v349
    %v979 = vadd.f32 %v947, %v352
    %v980 = vadd.f32 %v948, %v355
    %v981 = vadd.f32 %v949, %v358
    %v982 = vadd.f32 %v950, %v361
    %v983 = vadd.f32 %v951, %v364
    %v984 = vadd.f32 %v952, %v367
    %v985 = vadd.f32 %v953, %v370
    %v986 = vadd.f32 %v954, %v373
    %v987 = vadd.f32 %v955, %v376
    %v988 = vadd.f32 %v956, %v379
    %v989 = vadd.f32 %v957, %v382
    %v990 = vadd.f32 %v958, %v385
    %v991 = vadd.f32 %v959, %v388
    %v992 = vadd.f32 %v960, %v391
    %993 = vst [vmem:[#allocation5] sm:$0xff] %v961
    %994 = vst [vmem:[#allocation5 + $0x8] sm:$0xff] %v962
    %995 = vst [vmem:[#allocation5 + $0x10] sm:$0xff] %v963
    %996 = vst [vmem:[#allocation5 + $0x18] sm:$0xff] %v964
    %997 = vst [vmem:[#allocation5 + $0x20] sm:$0xff] %v965
    %998 = vst [vmem:[#allocation5 + $0x28] sm:$0xff] %v966
    %999 = vst [vmem:[#allocation5 + $0x30] sm:$0xff] %v967
    %1000 = vst [vmem:[#allocation5 + $0x38] sm:$0xff] %v968
    %1001 = vst [vmem:[#allocation5 + $0x40] sm:$0xff] %v969
    %1002 = vst [vmem:[#allocation5 + $0x48] sm:$0xff] %v970
    %1003 = vst [vmem:[#allocation5 + $0x50] sm:$0xff] %v971
    %1004 = vst [vmem:[#allocation5 + $0x58] sm:$0xff] %v972
    %1005 = vst [vmem:[#allocation5 + $0x60] sm:$0xff] %v973
    %1006 = vst [vmem:[#allocation5 + $0x68] sm:$0xff] %v974
    %1007 = vst [vmem:[#allocation5 + $0x70] sm:$0xff] %v975
    %1008 = vst [vmem:[#allocation5 + $0x78] sm:$0xff] %v976
    %1009 = vst [vmem:[#allocation5 + $0x80] sm:$0xff] %v977
    %1010 = vst [vmem:[#allocation5 + $0x88] sm:$0xff] %v978
    %1011 = vst [vmem:[#allocation5 + $0x90] sm:$0xff] %v979
    %1012 = vst [vmem:[#allocation5 + $0x98] sm:$0xff] %v980
    %1013 = vst [vmem:[#allocation5 + $0xa0] sm:$0xff] %v981
    %1014 = vst [vmem:[#allocation5 + $0xa8] sm:$0xff] %v982
    %1015 = vst [vmem:[#allocation5 + $0xb0] sm:$0xff] %v983
    %1016 = vst [vmem:[#allocation5 + $0xb8] sm:$0xff] %v984
    %1017 = vst [vmem:[#allocation5 + $0xc0] sm:$0xff] %v985
    %1018 = vst [vmem:[#allocation5 + $0xc8] sm:$0xff] %v986
    %1019 = vst [vmem:[#allocation5 + $0xd0] sm:$0xff] %v987
    %1020 = vst [vmem:[#allocation5 + $0xd8] sm:$0xff] %v988
    %1021 = vst [vmem:[#allocation5 + $0xe0] sm:$0xff] %v989
    %1022 = vst [vmem:[#allocation5 + $0xe8] sm:$0xff] %v990
    %1023 = vst [vmem:[#allocation5 + $0xf0] sm:$0xff] %v991
    %1024 = vst [vmem:[#allocation5 + $0xf8] sm:$0xff] %v992
    // Predicated region
    $region22: #{tpu_custom_call.1} parent=1 // pred_check
      _
    $region23: #{tpu_custom_call.1} parent=1 // pred_check_branch
      %1026 = sbr.rel (0) target = $region25
    $region24: #{tpu_custom_call.1} parent=1 // pred_region
      %1028 = vsyncadd [#allocation4], 0
      %s1029 = sshll.u32 [#allocation5], 4
      %s1030 = int_to_ptr.vmem [resolvable:$true] %s1029
      %s1031 = sshll.u32 %s4, 4
      %s1032 = int_to_ptr.hbm [resolvable:$true] %s1031
      %1037 = dma.vmem_to_hbm [thread:$0]  %s1030, 4096, %s1032, [#allocation4], 128, 128, 8
    $region25: #{tpu_custom_call.1} parent=1 // pred_fallthru
      _
    // Predicated region
    $region26: #{tpu_custom_call.1} parent=1 // pred_check
      _
    $region27: #{tpu_custom_call.1} parent=1 // pred_check_branch
      %1039 = sbr.rel (0) target = $region29
    $region28: #{tpu_custom_call.1} parent=1 // pred_region
      %1041 = dma.done [#allocation4], 4096
    $region29: #{tpu_custom_call.1} parent=1 // pred_fallthru
      _
    %1042 = vsyncpa [#allocation3], 1
    %1043 = vsyncpa [#allocation4], 1

</llo_original>
